<compile_context>
chip_gen: v7x
topology: tpu7x:2x2x1
jax: 0.10.0
libtpu: 0.0.40
codegen_flags: <defaults>
</compile_context>

<pallas_src>
import jax
import jax.numpy as jnp
from jax.experimental import pallas as pl
from jax.experimental.pallas import tpu as pltpu


# ----------------------------------------------------------------------------
# Default channel: identity, zero data movement (dominant optimization).
# ----------------------------------------------------------------------------
def transmit(encoded_points: jax.Array, encoded_points_log_var: jax.Array):
    """Communication channel between encoder and decoder (lossless identity).

    No bits change and no buffer needs to be produced, so the optimal channel
    is to hand the encoder outputs straight to the decoder.
    """
    return encoded_points, encoded_points_log_var


# ----------------------------------------------------------------------------
# Optional Pallas copy-channel (only if a distinct output buffer is required).
# ----------------------------------------------------------------------------
def _transmit_kernel(mu_ref, logvar_ref, mu_out_ref, logvar_out_ref):
    # Identity channel over one lane-dense tile.  Plain whole-tile assignment:
    # the kernel is HBM-bandwidth bound, so the vector load/store slots are
    # not the binding resource (pltpu.sync_copy VMEM->VMEM DMA would free the
    # vld/vst slots if real channel computation is ever added here).
    mu_out_ref[...] = mu_ref[...]
    logvar_out_ref[...] = logvar_ref[...]


def _vmem_budgets():
    """(live tile budget, vmem_limit_bytes) sized per TPU generation."""
    cap = 64 * 1024 * 1024  # conservative fallback = v7x physical VMEM
    try:
        info = pltpu.get_tpu_info()
        cap = int(getattr(info, "vmem_capacity_bytes", cap)) or cap
    except Exception:
        pass
    live_budget = (cap * 3) // 8   # 48 MiB on 128 MiB parts, 24 MiB on v7x
    vmem_limit = (cap * 3) // 4    # 96 MiB on 128 MiB parts, 48 MiB on v7x
    return live_budget, vmem_limit


def _sublane_multiple(itemsize: int) -> int:
    # Sub-32-bit dtypes pack along sublanes: 8 rows (f32), 16 (bf16), 32 (i8).
    return max(8, 32 // max(itemsize, 1))


# Only bother splitting a single-block batch into >=2 parallel grid steps
# (for the second TensorCore on v7x) when there is enough work to amortize
# the per-step overhead.
_MIN_ROWS_FOR_TC_SPLIT = 1024


def _choose_tile_b(B: int, D: int, itemsize: int, live_budget: int) -> int:
    """Largest batch tile whose double-buffered footprint fits the budget."""
    sub = _sublane_multiple(itemsize)
    # (2 inputs + 2 outputs) x 2 pipeline buffers x (tb x D x itemsize)
    bytes_per_row = 4 * 2 * D * itemsize
    tb = max(sub, live_budget // max(bytes_per_row, 1))
    tb = max(sub, (tb // sub) * sub)

    if tb >= B:
        if B >= _MIN_ROWS_FOR_TC_SPLIT and B >= 2 * sub:
            # Cap at ~half the batch (sublane-rounded) so the grid has at
            # least 2 parallel steps and both v7x TensorCores drive DMAs.
            half = -(-B // 2)
            tb = ((half + sub - 1) // sub) * sub
        else:
            tb = B  # tiny input: one block, no pipeline churn
    return min(tb, B)


def transmit_pallas(encoded_points: jax.Array,
                    encoded_points_log_var: jax.Array,
                    alias_outputs: bool = False):
    """Pallas identity channel that materializes output buffers.

    alias_outputs=True makes the outputs alias the inputs (no second HBM
    allocation) — ONLY use this when the inputs are donated at the enclosing
    jit boundary (jax.jit(..., donate_argnums=...)); otherwise XLA inserts a
    defensive copy of each input and the kernel becomes strictly slower.
    """
    assert encoded_points.shape == encoded_points_log_var.shape
    B, D = encoded_points.shape
    itemsize = max(encoded_points.dtype.itemsize,
                   encoded_points_log_var.dtype.itemsize)

    live_budget, vmem_limit = _vmem_budgets()
    tb = _choose_tile_b(B, D, itemsize, live_budget)
    grid = (pl.cdiv(B, tb),)

    # Full latent dim per block: lane-dense, unmasked full-width stores.
    # TODO(synk): if D is ever not a multiple of 128, pad/fold D to a
    # lane-dense multiple wrapper-side to avoid masked vst.msk partial stores.
    spec = pl.BlockSpec((tb, D), lambda i: (i, 0))

    out_shape = (
        jax.ShapeDtypeStruct((B, D), encoded_points.dtype),
        jax.ShapeDtypeStruct((B, D), encoded_points_log_var.dtype),
    )

    return pl.pallas_call(
        _transmit_kernel,
        grid_spec=pltpu.PrefetchScalarGridSpec(
            num_scalar_prefetch=0,
            grid=grid,
            in_specs=[spec, spec],
            out_specs=[spec, spec],
        ),
        out_shape=out_shape,
        input_output_aliases={0: 0, 1: 1} if alias_outputs else {},
        compiler_params=pltpu.CompilerParams(
            dimension_semantics=("parallel",),
            vmem_limit_bytes=vmem_limit,
        ),
    )(encoded_points, encoded_points_log_var)


if __name__ == "__main__":
    # TODO(synk): `Transmitter.forward` is abstract (no computation defined);
    # the identity channel is the minimal faithful concrete realization.
    key = jax.random.PRNGKey(0)
    k_mu, k_lv = jax.random.split(key)

    batch, latent_dim = 16, 128
    encoded_points = jax.random.normal(k_mu, (batch, latent_dim), jnp.float32)
    encoded_points_log_var = jax.random.normal(k_lv, (batch, latent_dim),
                                               jnp.float32)

    # 1) Default channel: zero-cost identity passthrough.
    mu_t, lv_t = transmit(encoded_points, encoded_points_log_var)
    jax.block_until_ready((mu_t, lv_t))
    assert mu_t.shape == encoded_points.shape
    assert lv_t.shape == encoded_points_log_var.shape
    assert jnp.allclose(mu_t, encoded_points)
    assert jnp.allclose(lv_t, encoded_points_log_var)

    # 2) Pallas copy-channel, non-donated (no aliasing; inputs remain valid).
    mu_p, lv_p = jax.jit(transmit_pallas)(encoded_points,
                                          encoded_points_log_var)
    jax.block_until_ready((mu_p, lv_p))
    assert jnp.allclose(mu_p, encoded_points)
    assert jnp.allclose(lv_p, encoded_points_log_var)

    # 3) Pallas copy-channel with donated inputs + output aliasing
    #    (true in-place channel: no second HBM buffer). Donate fresh copies
    #    so the originals stay usable for the correctness check.
    mu_copy = encoded_points + 0.0
    lv_copy = encoded_points_log_var + 0.0
    donated_channel = jax.jit(
        lambda a, b: transmit_pallas(a, b, alias_outputs=True),
        donate_argnums=(0, 1),
    )
    mu_d, lv_d = donated_channel(mu_copy, lv_copy)
    jax.block_until_ready((mu_d, lv_d))
    assert jnp.allclose(mu_d, encoded_points)
    assert jnp.allclose(lv_d, encoded_points_log_var)

    print("KERNEL_OK")
</pallas_src>

<mosaic_0001>
module attributes {stable_mosaic.version = 11 : i64} {
  func.func @_transmit_kernel(%arg0: i32, %arg1: memref<16x128xf32, #tpu.memory_space<vmem>>, %arg2: memref<16x128xf32, #tpu.memory_space<vmem>>, %arg3: memref<16x128xf32, #tpu.memory_space<vmem>>, %arg4: memref<16x128xf32, #tpu.memory_space<vmem>>) attributes {dimension_semantics = [#tpu.dimension_semantics<parallel>], iteration_bounds = array<i64: 1>, scalar_prefetch = 0 : i64, scratch_operands = 0 : i64, tpu.core_type = #tpu.core_type<tc>, window_params = [{transform_indices = @transform_0, window_bounds = array<i64: 16, 128>}, {transform_indices = @transform_1, window_bounds = array<i64: 16, 128>}, {transform_indices = @transform_2, window_bounds = array<i64: 16, 128>}, {transform_indices = @transform_3, window_bounds = array<i64: 16, 128>}]} {
    %c0 = arith.constant 0 : index
    %c0_0 = arith.constant 0 : index
    %0 = vector.load %arg1[%c0, %c0_0] : memref<16x128xf32, #tpu.memory_space<vmem>>, vector<16x128xf32>
    %c0_1 = arith.constant 0 : index
    %c0_2 = arith.constant 0 : index
    %1 = vector.load %arg3[%c0_1, %c0_2] : memref<16x128xf32, #tpu.memory_space<vmem>>, vector<16x128xf32>
    tpu.vector_store %arg3[%c0_1, %c0_2], %0 {strides = array<i32>} : memref<16x128xf32, #tpu.memory_space<vmem>>, vector<16x128xf32>,
    %c0_3 = arith.constant 0 : index
    %c0_4 = arith.constant 0 : index
    %2 = vector.load %arg2[%c0_3, %c0_4] : memref<16x128xf32, #tpu.memory_space<vmem>>, vector<16x128xf32>
    %c0_5 = arith.constant 0 : index
    %c0_6 = arith.constant 0 : index
    %3 = vector.load %arg4[%c0_5, %c0_6] : memref<16x128xf32, #tpu.memory_space<vmem>>, vector<16x128xf32>
    tpu.vector_store %arg4[%c0_5, %c0_6], %2 {strides = array<i32>} : memref<16x128xf32, #tpu.memory_space<vmem>>, vector<16x128xf32>,
    return
  }
  func.func @transform_0(%arg0: i32) -> (i32, i32) {
    %c0_i32 = arith.constant 0 : i32
    %c0_i32_0 = arith.constant 0 : i32
    return %arg0, %c0_i32 : i32, i32
  }
  func.func @transform_1(%arg0: i32) -> (i32, i32) {
    %c0_i32 = arith.constant 0 : i32
    %c0_i32_0 = arith.constant 0 : i32
    return %arg0, %c0_i32 : i32, i32
  }
  func.func @transform_2(%arg0: i32) -> (i32, i32) {
    %c0_i32 = arith.constant 0 : i32
    %c0_i32_0 = arith.constant 0 : i32
    return %arg0, %c0_i32 : i32, i32
  }
  func.func @transform_3(%arg0: i32) -> (i32, i32) {
    %c0_i32 = arith.constant 0 : i32
    %c0_i32_0 = arith.constant 0 : i32
    return %arg0, %c0_i32 : i32, i32
  }
}

</mosaic_0001>

<llo_original>
// kernel: transmit_pallas.1
$region0: #{transmit_pallas.1}
  #allocation0 [shape = 'u32[]', space=smem, size = 0x4, offset = 0x4, fixed_abs, tag = 'smem constant byte address 0x4 - core index']
  #allocation1 [shape = 'u32[144,128]{1,0:T(1,128)}', space=vmem, size = 0x12000, scoped, tag = 'internal scratch']
  %s0 = inlined_call_operand.hbm [shape: f32[16,128], index: 0, kind: input, shape index: {}]
  %s1 = inlined_call_operand.hbm [shape: f32[16,128], index: 1, kind: input, shape index: {}]
  %s2 = inlined_call_operand.hbm [shape: f32[16,128], index: 2, kind: output, shape index: {0}]
  %s3 = inlined_call_operand.hbm [shape: f32[16,128], index: 3, kind: output, shape index: {1}]
  %4 = xla_tuple %s2, %s3
  %s5 = sld [smem:[#allocation0]]
  $region34: #{transmit_pallas.1} parent=0
    _
  %s7 = ssub.s32 1, %s5
  %s8 = scalar_select 0, %s7, %s5
  $region1: #{transmit_pallas.1} parent=0
    #allocation2 [shape = 'u8[8192]{0}', space=vmem, size = 0x2000, scoped, tag = 'input window, operand 0, single buffered']
    #allocation3 [shape = 's32[1]{0}', space=sflag, size = 0x4, scoped, tag = 'scoped memory for transmit_pallas.1']
    #allocation4 [shape = 's32[1]{0}', space=sflag, size = 0x4, scoped, tag = 'scoped memory for transmit_pallas.1']
    #allocation5 [shape = 'u8[8192]{0}', space=vmem, size = 0x2000, scoped, tag = 'input window, operand 1, single buffered']
    #allocation6 [shape = 's32[1]{0}', space=sflag, size = 0x4, scoped, tag = 'scoped memory for transmit_pallas.1']
    #allocation7 [shape = 'u8[8192]{0}', space=vmem, size = 0x2000, scoped, tag = 'output window, operand 0, single buffered']
    #allocation8 [shape = 'u8[8192]{0}', space=vmem, size = 0x2000, scoped, tag = 'output window, operand 1, single buffered']
    #allocation9 [shape = 's32[1]{0}', space=sflag, size = 0x4, scoped, tag = 'scoped memory for transmit_pallas.1']
    %9 = vsyncpa [#allocation3], 0
    %10 = vsyncpa [#allocation6], 0
    %11 = vsyncpa [#allocation4], 0
    %12 = vsyncpa [#allocation9], 0
    // Predicated region
    $region2: #{transmit_pallas.1} parent=1 // pred_check
      _
    $region3: #{transmit_pallas.1} parent=1 // pred_check_branch
      %14 = sbr.rel (0) target = $region5
    $region4: #{transmit_pallas.1} parent=1 // pred_region
      %s16 = ssub.s32 256, 256
      %17 = vsyncadd [#allocation3], %s16
      %s18 = sshll.u32 [#allocation2], 4
      %s19 = int_to_ptr.vmem [resolvable:$true] %s18
      %24 = dma.hbm_to_vmem [thread:$0]  %s0, 256, %s19, [#allocation3], 128, 128, 8
    $region5: #{transmit_pallas.1} parent=1 // pred_fallthru
      _
    // Predicated region
    $region6: #{transmit_pallas.1} parent=1 // pred_check
      _
    $region7: #{transmit_pallas.1} parent=1 // pred_check_branch
      %26 = sbr.rel (0) target = $region9
    $region8: #{transmit_pallas.1} parent=1 // pred_region
      %s28 = ssub.s32 256, 256
      %29 = vsyncadd [#allocation6], %s28
      %s30 = sshll.u32 [#allocation5], 4
      %s31 = int_to_ptr.vmem [resolvable:$true] %s30
      %36 = dma.hbm_to_vmem [thread:$0]  %s1, 256, %s31, [#allocation6], 128, 128, 8
    $region9: #{transmit_pallas.1} parent=1 // pred_fallthru
      _
    // Predicated region
    $region10: #{transmit_pallas.1} parent=1 // pred_check
      _
    $region11: #{transmit_pallas.1} parent=1 // pred_check_branch
      %38 = sbr.rel (0) target = $region13
    $region12: #{transmit_pallas.1} parent=1 // pred_region
      %39 = dma.done [#allocation3], 256
    $region13: #{transmit_pallas.1} parent=1 // pred_fallthru
      _
    // Predicated region
    $region14: #{transmit_pallas.1} parent=1 // pred_check
      _
    $region15: #{transmit_pallas.1} parent=1 // pred_check_branch
      %41 = sbr.rel (0) target = $region17
    $region16: #{transmit_pallas.1} parent=1 // pred_region
      %42 = dma.done [#allocation6], 256
    $region17: #{transmit_pallas.1} parent=1 // pred_fallthru
      _
    %v43 = vld [vmem:[#allocation2] sm:$0xff]
    %v44 = vld [vmem:[#allocation2 + $0x8] sm:$0xff]
    %45 = vst [vmem:[#allocation7] sm:$0xff] %v43
    %46 = vst [vmem:[#allocation7 + $0x8] sm:$0xff] %v44
    %v47 = vld [vmem:[#allocation5] sm:$0xff]
    %v48 = vld [vmem:[#allocation5 + $0x8] sm:$0xff]
    %49 = vst [vmem:[#allocation8] sm:$0xff] %v47
    %50 = vst [vmem:[#allocation8 + $0x8] sm:$0xff] %v48
    // Predicated region
    $region18: #{transmit_pallas.1} parent=1 // pred_check
      _
    $region19: #{transmit_pallas.1} parent=1 // pred_check_branch
      %52 = sbr.rel (0) target = $region21
    $region20: #{transmit_pallas.1} parent=1 // pred_region
      %s54 = ssub.s32 256, 256
      %55 = vsyncadd [#allocation4], %s54
      %s56 = sshll.u32 [#allocation7], 4
      %s57 = int_to_ptr.vmem [resolvable:$true] %s56
      %62 = dma.vmem_to_hbm [thread:$0]  %s57, 256, %s2, [#allocation4], 128, 128, 8
    $region21: #{transmit_pallas.1} parent=1 // pred_fallthru
      _
    // Predicated region
    $region22: #{transmit_pallas.1} parent=1 // pred_check
      _
    $region23: #{transmit_pallas.1} parent=1 // pred_check_branch
      %64 = sbr.rel (0) target = $region25
    $region24: #{transmit_pallas.1} parent=1 // pred_region
      %s66 = ssub.s32 256, 256
      %67 = vsyncadd [#allocation9], %s66
      %s68 = sshll.u32 [#allocation8], 4
      %s69 = int_to_ptr.vmem [resolvable:$true] %s68
      %74 = dma.vmem_to_hbm [thread:$0]  %s69, 256, %s3, [#allocation9], 128, 128, 8
    $region25: #{transmit_pallas.1} parent=1 // pred_fallthru
      _
    // Predicated region
    $region26: #{transmit_pallas.1} parent=1 // pred_check
      _
    $region27: #{transmit_pallas.1} parent=1 // pred_check_branch
      %76 = sbr.rel (0) target = $region29
    $region28: #{transmit_pallas.1} parent=1 // pred_region
      %77 = dma.done [#allocation4], 256
    $region29: #{transmit_pallas.1} parent=1 // pred_fallthru
      _
    // Predicated region
    $region30: #{transmit_pallas.1} parent=1 // pred_check
      _
    $region31: #{transmit_pallas.1} parent=1 // pred_check_branch
      %79 = sbr.rel (0) target = $region33
    $region32: #{transmit_pallas.1} parent=1 // pred_region
      %80 = dma.done [#allocation9], 256
    $region33: #{transmit_pallas.1} parent=1 // pred_fallthru
      _
    %81 = vsyncpa [#allocation3], 1
    %82 = vsyncpa [#allocation6], 1
    %83 = vsyncpa [#allocation4], 1
    %84 = vsyncpa [#allocation9], 1

</llo_original>
